<compile_context>
chip_gen: v7x
topology: tpu7x:2x2x1
jax: 0.10.0
libtpu: 0.0.40
codegen_flags: <defaults>
</compile_context>

<pallas_src>
import jax
import jax.numpy as jnp
from jax.experimental import pallas as pl
from jax.experimental.pallas import tpu as pltpu


def gru_fc_kernel(x_ref, wih_ref, whh_ref, bi_ref, bhn_ref, wfc_ref, bfc_ref,
                  out_ref, gi_ref):
    Bp = out_ref.shape[0]            # padded batch (multiple of 8 sublanes)
    H = bhn_ref.shape[1]             # true hidden size (gates packed: 3*H <= lanes)
    TB = gi_ref.shape[0]             # T * Bp
    T = TB // Bp

    # ---- Hoisted input projection for the whole sequence: one MXU matmul. ----
    # gi_ref[t*Bp:(t+1)*Bp, :] = x_t @ W_ih^T (+ folded biases), packed as
    # lanes [0:H)=r, [H:2H)=z, [2H:3H)=n, remaining lanes zero.
    gi_ref[...] = (jnp.dot(x_ref[...], wih_ref[...],
                           preferred_element_type=jnp.float32)
                   + bi_ref[...])

    # Hoist the (small) b_hn broadcast out of the loop (JAX does not CSE it).
    bhn = jnp.broadcast_to(bhn_ref[...], (Bp, H))

    def step(t, h):
        row = pl.multiple_of(t * Bp, Bp)
        g = gi_ref[pl.ds(row, Bp), :]                         # (Bp, GP) f32, packed
        # Single packed MXU weight tile on the serial critical path; bf16 operands,
        # f32 accumulate.  h is carried in f32, cast only for the matmul.
        gh = jnp.dot(h.astype(jnp.bfloat16), whh_ref[...],
                     preferred_element_type=jnp.float32)      # (Bp, GP)
        # r and z share one EUP sigmoid pass.
        rz = jax.nn.sigmoid(g[:, 0:2 * H] + gh[:, 0:2 * H])
        r = rz[:, 0:H]
        z = rz[:, H:2 * H]
        n = jnp.tanh(g[:, 2 * H:3 * H] + r * (gh[:, 2 * H:3 * H] + bhn))
        return (1.0 - z) * n + z * h

    h0 = jnp.zeros((Bp, H), jnp.float32)
    h_last = jax.lax.fori_loop(0, T, step, h0,
                               unroll=(True if T <= 16 else 8))

    # Final dense layer on the last hidden state (f32), written unconditionally
    # as a lane-dense (Bp, Cp) slab.
    out_ref[...] = (jnp.dot(h_last, wfc_ref[...],
                            preferred_element_type=jnp.float32)
                    + bfc_ref[...])


def rnn_forward(x_bft, w_ih, w_hh, b_ih, b_hh, w_fc, b_fc):
    """x_bft: (B, n_mfcc, T) float32 -- mirrors the PyTorch forward(x) input."""
    B, F, T = x_bft.shape
    H = w_hh.shape[1]
    C = w_fc.shape[0]

    LANE, SUB = 128, 8
    GP = ((3 * H + LANE - 1) // LANE) * LANE      # packed gate width (128 for H=32)
    Cp = ((C + LANE - 1) // LANE) * LANE
    Bp = ((B + SUB - 1) // SUB) * SUB

    f32, bf16 = jnp.float32, jnp.bfloat16

    # (B, F, T) -> (T, B, F) -> pad batch -> flatten to (T*Bp, F) for one big matmul.
    x_tbf = jnp.transpose(x_bft, (2, 0, 1)).astype(f32)
    x_pad = jnp.pad(x_tbf, ((0, 0), (0, Bp - B), (0, 0)))
    x2d = x_pad.reshape(T * Bp, F)

    # Packed-gate, transposed weights.  PyTorch stacks W_ir|W_iz|W_in along rows,
    # so W.T already has the gates packed along the lane dim; zero-pad to GP lanes.
    wih_packed = jnp.pad(w_ih.T.astype(f32), ((0, 0), (0, GP - 3 * H)))       # (F, GP)
    whh_packed = jnp.pad(w_hh.T.astype(f32),
                         ((0, 0), (0, GP - 3 * H))).astype(bf16)              # (H, GP) bf16

    b_ir, b_iz, b_in = b_ih[0:H], b_ih[H:2 * H], b_ih[2 * H:3 * H]
    b_hr, b_hz, b_hn = b_hh[0:H], b_hh[H:2 * H], b_hh[2 * H:3 * H]
    # Folded biases: r and z gates get (b_i + b_h); n gate keeps only b_in here,
    # b_hn is applied inside the r*(...) term per PyTorch GRU semantics.
    bi = jnp.pad(jnp.concatenate([b_ir + b_hr, b_iz + b_hz, b_in]).astype(f32),
                 (0, GP - 3 * H)).reshape(1, GP)
    bhn = b_hn.astype(f32).reshape(1, H)

    wfc_t = jnp.pad(w_fc.T.astype(f32), ((0, 0), (0, Cp - C)))                # (H, Cp)
    bfc = jnp.pad(b_fc.astype(f32), (0, Cp - C)).reshape(1, Cp)

    out_padded = pl.pallas_call(
        gru_fc_kernel,
        out_shape=jax.ShapeDtypeStruct((Bp, Cp), jnp.float32),
        in_specs=[pl.BlockSpec(memory_space=pltpu.MemorySpace.VMEM)] * 7,
        out_specs=pl.BlockSpec(memory_space=pltpu.MemorySpace.VMEM),
        scratch_shapes=[pltpu.VMEM((T * Bp, GP), jnp.float32)],
    )(x2d, wih_packed, whh_packed, bi, bhn, wfc_t, bfc)

    return out_padded[:B, :C]


def rnn_reference(x_bft, w_ih, w_hh, b_ih, b_hh, w_fc, b_fc):
    """Pure-JAX f32 reference matching torch.nn.GRU + nn.Linear semantics."""
    B, F, T = x_bft.shape
    H = w_hh.shape[1]
    x_tbf = jnp.transpose(x_bft, (2, 0, 1))

    def step(h, x_t):
        gi = x_t @ w_ih.T + b_ih
        gh = h @ w_hh.T + b_hh
        r = jax.nn.sigmoid(gi[:, 0:H] + gh[:, 0:H])
        z = jax.nn.sigmoid(gi[:, H:2 * H] + gh[:, H:2 * H])
        n = jnp.tanh(gi[:, 2 * H:] + r * gh[:, 2 * H:])
        h_new = (1.0 - z) * n + z * h
        return h_new, None

    h0 = jnp.zeros((B, H), jnp.float32)
    h_last, _ = jax.lax.scan(step, h0, x_tbf)
    return h_last @ w_fc.T + b_fc


if __name__ == "__main__":
    # Small shapes consistent with the module: n_mfcc=16, seq=8, hidden=32,
    # n_classes=8, batch=2.
    B, F, T, H, C = 2, 16, 8, 32, 8

    key = jax.random.PRNGKey(0)
    k = jax.random.split(key, 8)
    scale = 1.0 / jnp.sqrt(H)

    x = jax.random.normal(k[0], (B, F, T), jnp.float32)
    w_ih = jax.random.uniform(k[1], (3 * H, F), jnp.float32, -scale, scale)
    w_hh = jax.random.uniform(k[2], (3 * H, H), jnp.float32, -scale, scale)
    b_ih = jax.random.uniform(k[3], (3 * H,), jnp.float32, -scale, scale)
    b_hh = jax.random.uniform(k[4], (3 * H,), jnp.float32, -scale, scale)
    w_fc = jax.random.uniform(k[5], (C, H), jnp.float32, -scale, scale)
    b_fc = jax.random.uniform(k[6], (C,), jnp.float32, -scale, scale)

    out = rnn_forward(x, w_ih, w_hh, b_ih, b_hh, w_fc, b_fc)
    out = jax.block_until_ready(out)

    ref = rnn_reference(x, w_ih, w_hh, b_ih, b_hh, w_fc, b_fc)
    assert out.shape == (B, C)
    # Tolerance loosened vs. pure-f32: the recurrent matmul uses bf16 operands
    # (f32 accumulate), per the perf review.
    assert jnp.allclose(out, ref, rtol=2e-2, atol=2e-2), "mismatch vs reference"

    print("KERNEL_OK")
</pallas_src>

<mosaic_0001>
module attributes {stable_mosaic.version = 11 : i64} {
  func.func @gru_fc_kernel(%arg0: memref<64x16xf32, #tpu.memory_space<vmem>>, %arg1: memref<16x128xf32, #tpu.memory_space<vmem>>, %arg2: memref<32x128xbf16, #tpu.memory_space<vmem>>, %arg3: memref<1x128xf32, #tpu.memory_space<vmem>>, %arg4: memref<1x32xf32, #tpu.memory_space<vmem>>, %arg5: memref<32x128xf32, #tpu.memory_space<vmem>>, %arg6: memref<1x128xf32, #tpu.memory_space<vmem>>, %arg7: memref<8x128xf32, #tpu.memory_space<vmem>>, %arg8: memref<64x128xf32, #tpu.memory_space<vmem>>) attributes {dimension_semantics = [], scalar_prefetch = 0 : i64, scratch_operands = 1 : i64, tpu.core_type = #tpu.core_type<tc>} {
    %c0 = arith.constant 0 : index
    %c0_0 = arith.constant 0 : index
    %0 = vector.load %arg0[%c0, %c0_0] : memref<64x16xf32, #tpu.memory_space<vmem>>, vector<64x16xf32>
    %c0_1 = arith.constant 0 : index
    %c0_2 = arith.constant 0 : index
    %1 = vector.load %arg1[%c0_1, %c0_2] : memref<16x128xf32, #tpu.memory_space<vmem>>, vector<16x128xf32>
    %cst = arith.constant dense<0.000000e+00> : vector<64x128xf32>
    %2 = tpu.matmul %0, %1, %cst {dimension_numbers = #tpu.dot_dimension_numbers<[1], [0], [0], [1], [0, 0, 1, 1], [], []>} : vector<64x16xf32>, vector<16x128xf32>, vector<64x128xf32> -> vector<64x128xf32>
    %c0_3 = arith.constant 0 : index
    %c0_4 = arith.constant 0 : index
    %3 = vector.load %arg3[%c0_3, %c0_4] : memref<1x128xf32, #tpu.memory_space<vmem>>, vector<1x128xf32>
    %4 = vector.broadcast %3 : vector<1x128xf32> to vector<64x128xf32>
    %5 = arith.addf %2, %4 : vector<64x128xf32>
    %c0_5 = arith.constant 0 : index
    %c0_6 = arith.constant 0 : index
    %6 = vector.load %arg8[%c0_5, %c0_6] : memref<64x128xf32, #tpu.memory_space<vmem>>, vector<64x128xf32>
    tpu.vector_store %arg8[%c0_5, %c0_6], %5 {strides = array<i32>} : memref<64x128xf32, #tpu.memory_space<vmem>>, vector<64x128xf32>,
    %c0_7 = arith.constant 0 : index
    %c0_8 = arith.constant 0 : index
    %7 = vector.load %arg4[%c0_7, %c0_8] : memref<1x32xf32, #tpu.memory_space<vmem>>, vector<1x32xf32>
    %8 = vector.shape_cast %7 : vector<1x32xf32> to vector<1x32xf32>
    %9 = vector.broadcast %8 : vector<1x32xf32> to vector<8x32xf32>
    %cst_9 = arith.constant 0.000000e+00 : f32
    %10 = vector.broadcast %cst_9 : f32 to vector<8x32xf32>
    %c0_i32 = arith.constant 0 : i32
    %c8_i32 = arith.constant 8 : i32
    %11 = arith.muli %c0_i32, %c8_i32 : i32
    %12 = tpu.assume_multiple %11, 8 : i32
    %13 = arith.index_cast %12 : i32 to index
    %c0_10 = arith.constant 0 : index
    %14 = vector.load %arg8[%13, %c0_10] : memref<64x128xf32, #tpu.memory_space<vmem>>, vector<8x128xf32>
    %15 = arith.truncf %10 : vector<8x32xf32> to vector<8x32xbf16>
    %c0_11 = arith.constant 0 : index
    %c0_12 = arith.constant 0 : index
    %16 = vector.load %arg2[%c0_11, %c0_12] : memref<32x128xbf16, #tpu.memory_space<vmem>>, vector<32x128xbf16>
    %cst_13 = arith.constant dense<0.000000e+00> : vector<8x128xf32>
    %17 = tpu.matmul %15, %16, %cst_13 {dimension_numbers = #tpu.dot_dimension_numbers<[1], [0], [0], [1], [0, 0, 1, 1], [], []>} : vector<8x32xbf16>, vector<32x128xbf16>, vector<8x128xf32> -> vector<8x128xf32>
    %18 = vector.extract_strided_slice %14 {offsets = [0, 0], sizes = [8, 64], strides = [1, 1]} : vector<8x128xf32> to vector<8x64xf32>
    %19 = vector.extract_strided_slice %17 {offsets = [0, 0], sizes = [8, 64], strides = [1, 1]} : vector<8x128xf32> to vector<8x64xf32>
    %20 = arith.addf %18, %19 : vector<8x64xf32>
    %21 = arith.negf %20 : vector<8x64xf32>
    %22 = math.exp %21 : vector<8x64xf32>
    %cst_14 = arith.constant 1.000000e+00 : f32
    %23 = vector.broadcast %cst_14 : f32 to vector<8x64xf32>
    %24 = arith.addf %23, %22 : vector<8x64xf32>
    %25 = arith.divf %23, %24 : vector<8x64xf32>
    %26 = vector.extract_strided_slice %25 {offsets = [0, 0], sizes = [8, 32], strides = [1, 1]} : vector<8x64xf32> to vector<8x32xf32>
    %27 = vector.extract_strided_slice %25 {offsets = [0, 32], sizes = [8, 32], strides = [1, 1]} : vector<8x64xf32> to vector<8x32xf32>
    %28 = vector.extract_strided_slice %14 {offsets = [0, 64], sizes = [8, 32], strides = [1, 1]} : vector<8x128xf32> to vector<8x32xf32>
    %29 = vector.extract_strided_slice %17 {offsets = [0, 64], sizes = [8, 32], strides = [1, 1]} : vector<8x128xf32> to vector<8x32xf32>
    %30 = arith.addf %29, %9 : vector<8x32xf32>
    %31 = arith.mulf %26, %30 : vector<8x32xf32>
    %32 = arith.addf %28, %31 : vector<8x32xf32>
    %33 = math.tanh %32 : vector<8x32xf32>
    %cst_15 = arith.constant 1.000000e+00 : f32
    %34 = vector.broadcast %cst_15 : f32 to vector<8x32xf32>
    %35 = arith.subf %34, %27 : vector<8x32xf32>
    %36 = arith.mulf %35, %33 : vector<8x32xf32>
    %37 = arith.mulf %27, %10 : vector<8x32xf32>
    %38 = arith.addf %36, %37 : vector<8x32xf32>
    %c1_i32 = arith.constant 1 : i32
    %c8_i32_16 = arith.constant 8 : i32
    %39 = arith.muli %c1_i32, %c8_i32_16 : i32
    %40 = tpu.assume_multiple %39, 8 : i32
    %41 = arith.index_cast %40 : i32 to index
    %c0_17 = arith.constant 0 : index
    %42 = vector.load %arg8[%41, %c0_17] : memref<64x128xf32, #tpu.memory_space<vmem>>, vector<8x128xf32>
    %43 = arith.truncf %38 : vector<8x32xf32> to vector<8x32xbf16>
    %c0_18 = arith.constant 0 : index
    %c0_19 = arith.constant 0 : index
    %44 = vector.load %arg2[%c0_18, %c0_19] : memref<32x128xbf16, #tpu.memory_space<vmem>>, vector<32x128xbf16>
    %cst_20 = arith.constant dense<0.000000e+00> : vector<8x128xf32>
    %45 = tpu.matmul %43, %44, %cst_20 {dimension_numbers = #tpu.dot_dimension_numbers<[1], [0], [0], [1], [0, 0, 1, 1], [], []>} : vector<8x32xbf16>, vector<32x128xbf16>, vector<8x128xf32> -> vector<8x128xf32>
    %46 = vector.extract_strided_slice %42 {offsets = [0, 0], sizes = [8, 64], strides = [1, 1]} : vector<8x128xf32> to vector<8x64xf32>
    %47 = vector.extract_strided_slice %45 {offsets = [0, 0], sizes = [8, 64], strides = [1, 1]} : vector<8x128xf32> to vector<8x64xf32>
    %48 = arith.addf %46, %47 : vector<8x64xf32>
    %49 = arith.negf %48 : vector<8x64xf32>
    %50 = math.exp %49 : vector<8x64xf32>
    %cst_21 = arith.constant 1.000000e+00 : f32
    %51 = vector.broadcast %cst_21 : f32 to vector<8x64xf32>
    %52 = arith.addf %51, %50 : vector<8x64xf32>
    %53 = arith.divf %51, %52 : vector<8x64xf32>
    %54 = vector.extract_strided_slice %53 {offsets = [0, 0], sizes = [8, 32], strides = [1, 1]} : vector<8x64xf32> to vector<8x32xf32>
    %55 = vector.extract_strided_slice %53 {offsets = [0, 32], sizes = [8, 32], strides = [1, 1]} : vector<8x64xf32> to vector<8x32xf32>
    %56 = vector.extract_strided_slice %42 {offsets = [0, 64], sizes = [8, 32], strides = [1, 1]} : vector<8x128xf32> to vector<8x32xf32>
    %57 = vector.extract_strided_slice %45 {offsets = [0, 64], sizes = [8, 32], strides = [1, 1]} : vector<8x128xf32> to vector<8x32xf32>
    %58 = arith.addf %57, %9 : vector<8x32xf32>
    %59 = arith.mulf %54, %58 : vector<8x32xf32>
    %60 = arith.addf %56, %59 : vector<8x32xf32>
    %61 = math.tanh %60 : vector<8x32xf32>
    %cst_22 = arith.constant 1.000000e+00 : f32
    %62 = vector.broadcast %cst_22 : f32 to vector<8x32xf32>
    %63 = arith.subf %62, %55 : vector<8x32xf32>
    %64 = arith.mulf %63, %61 : vector<8x32xf32>
    %65 = arith.mulf %55, %38 : vector<8x32xf32>
    %66 = arith.addf %64, %65 : vector<8x32xf32>
    %c2_i32 = arith.constant 2 : i32
    %c8_i32_23 = arith.constant 8 : i32
    %67 = arith.muli %c2_i32, %c8_i32_23 : i32
    %68 = tpu.assume_multiple %67, 8 : i32
    %69 = arith.index_cast %68 : i32 to index
    %c0_24 = arith.constant 0 : index
    %70 = vector.load %arg8[%69, %c0_24] : memref<64x128xf32, #tpu.memory_space<vmem>>, vector<8x128xf32>
    %71 = arith.truncf %66 : vector<8x32xf32> to vector<8x32xbf16>
    %c0_25 = arith.constant 0 : index
    %c0_26 = arith.constant 0 : index
    %72 = vector.load %arg2[%c0_25, %c0_26] : memref<32x128xbf16, #tpu.memory_space<vmem>>, vector<32x128xbf16>
    %cst_27 = arith.constant dense<0.000000e+00> : vector<8x128xf32>
    %73 = tpu.matmul %71, %72, %cst_27 {dimension_numbers = #tpu.dot_dimension_numbers<[1], [0], [0], [1], [0, 0, 1, 1], [], []>} : vector<8x32xbf16>, vector<32x128xbf16>, vector<8x128xf32> -> vector<8x128xf32>
    %74 = vector.extract_strided_slice %70 {offsets = [0, 0], sizes = [8, 64], strides = [1, 1]} : vector<8x128xf32> to vector<8x64xf32>
    %75 = vector.extract_strided_slice %73 {offsets = [0, 0], sizes = [8, 64], strides = [1, 1]} : vector<8x128xf32> to vector<8x64xf32>
    %76 = arith.addf %74, %75 : vector<8x64xf32>
    %77 = arith.negf %76 : vector<8x64xf32>
    %78 = math.exp %77 : vector<8x64xf32>
    %cst_28 = arith.constant 1.000000e+00 : f32
    %79 = vector.broadcast %cst_28 : f32 to vector<8x64xf32>
    %80 = arith.addf %79, %78 : vector<8x64xf32>
    %81 = arith.divf %79, %80 : vector<8x64xf32>
    %82 = vector.extract_strided_slice %81 {offsets = [0, 0], sizes = [8, 32], strides = [1, 1]} : vector<8x64xf32> to vector<8x32xf32>
    %83 = vector.extract_strided_slice %81 {offsets = [0, 32], sizes = [8, 32], strides = [1, 1]} : vector<8x64xf32> to vector<8x32xf32>
    %84 = vector.extract_strided_slice %70 {offsets = [0, 64], sizes = [8, 32], strides = [1, 1]} : vector<8x128xf32> to vector<8x32xf32>
    %85 = vector.extract_strided_slice %73 {offsets = [0, 64], sizes = [8, 32], strides = [1, 1]} : vector<8x128xf32> to vector<8x32xf32>
    %86 = arith.addf %85, %9 : vector<8x32xf32>
    %87 = arith.mulf %82, %86 : vector<8x32xf32>
    %88 = arith.addf %84, %87 : vector<8x32xf32>
    %89 = math.tanh %88 : vector<8x32xf32>
    %cst_29 = arith.constant 1.000000e+00 : f32
    %90 = vector.broadcast %cst_29 : f32 to vector<8x32xf32>
    %91 = arith.subf %90, %83 : vector<8x32xf32>
    %92 = arith.mulf %91, %89 : vector<8x32xf32>
    %93 = arith.mulf %83, %66 : vector<8x32xf32>
    %94 = arith.addf %92, %93 : vector<8x32xf32>
    %c3_i32 = arith.constant 3 : i32
    %c8_i32_30 = arith.constant 8 : i32
    %95 = arith.muli %c3_i32, %c8_i32_30 : i32
    %96 = tpu.assume_multiple %95, 8 : i32
    %97 = arith.index_cast %96 : i32 to index
    %c0_31 = arith.constant 0 : index
    %98 = vector.load %arg8[%97, %c0_31] : memref<64x128xf32, #tpu.memory_space<vmem>>, vector<8x128xf32>
    %99 = arith.truncf %94 : vector<8x32xf32> to vector<8x32xbf16>
    %c0_32 = arith.constant 0 : index
    %c0_33 = arith.constant 0 : index
    %100 = vector.load %arg2[%c0_32, %c0_33] : memref<32x128xbf16, #tpu.memory_space<vmem>>, vector<32x128xbf16>
    %cst_34 = arith.constant dense<0.000000e+00> : vector<8x128xf32>
    %101 = tpu.matmul %99, %100, %cst_34 {dimension_numbers = #tpu.dot_dimension_numbers<[1], [0], [0], [1], [0, 0, 1, 1], [], []>} : vector<8x32xbf16>, vector<32x128xbf16>, vector<8x128xf32> -> vector<8x128xf32>
    %102 = vector.extract_strided_slice %98 {offsets = [0, 0], sizes = [8, 64], strides = [1, 1]} : vector<8x128xf32> to vector<8x64xf32>
    %103 = vector.extract_strided_slice %101 {offsets = [0, 0], sizes = [8, 64], strides = [1, 1]} : vector<8x128xf32> to vector<8x64xf32>
    %104 = arith.addf %102, %103 : vector<8x64xf32>
    %105 = arith.negf %104 : vector<8x64xf32>
    %106 = math.exp %105 : vector<8x64xf32>
    %cst_35 = arith.constant 1.000000e+00 : f32
    %107 = vector.broadcast %cst_35 : f32 to vector<8x64xf32>
    %108 = arith.addf %107, %106 : vector<8x64xf32>
    %109 = arith.divf %107, %108 : vector<8x64xf32>
    %110 = vector.extract_strided_slice %109 {offsets = [0, 0], sizes = [8, 32], strides = [1, 1]} : vector<8x64xf32> to vector<8x32xf32>
    %111 = vector.extract_strided_slice %109 {offsets = [0, 32], sizes = [8, 32], strides = [1, 1]} : vector<8x64xf32> to vector<8x32xf32>
    %112 = vector.extract_strided_slice %98 {offsets = [0, 64], sizes = [8, 32], strides = [1, 1]} : vector<8x128xf32> to vector<8x32xf32>
    %113 = vector.extract_strided_slice %101 {offsets = [0, 64], sizes = [8, 32], strides = [1, 1]} : vector<8x128xf32> to vector<8x32xf32>
    %114 = arith.addf %113, %9 : vector<8x32xf32>
    %115 = arith.mulf %110, %114 : vector<8x32xf32>
    %116 = arith.addf %112, %115 : vector<8x32xf32>
    %117 = math.tanh %116 : vector<8x32xf32>
    %cst_36 = arith.constant 1.000000e+00 : f32
    %118 = vector.broadcast %cst_36 : f32 to vector<8x32xf32>
    %119 = arith.subf %118, %111 : vector<8x32xf32>
    %120 = arith.mulf %119, %117 : vector<8x32xf32>
    %121 = arith.mulf %111, %94 : vector<8x32xf32>
    %122 = arith.addf %120, %121 : vector<8x32xf32>
    %c4_i32 = arith.constant 4 : i32
    %c8_i32_37 = arith.constant 8 : i32
    %123 = arith.muli %c4_i32, %c8_i32_37 : i32
    %124 = tpu.assume_multiple %123, 8 : i32
    %125 = arith.index_cast %124 : i32 to index
    %c0_38 = arith.constant 0 : index
    %126 = vector.load %arg8[%125, %c0_38] : memref<64x128xf32, #tpu.memory_space<vmem>>, vector<8x128xf32>
    %127 = arith.truncf %122 : vector<8x32xf32> to vector<8x32xbf16>
    %c0_39 = arith.constant 0 : index
    %c0_40 = arith.constant 0 : index
    %128 = vector.load %arg2[%c0_39, %c0_40] : memref<32x128xbf16, #tpu.memory_space<vmem>>, vector<32x128xbf16>
    %cst_41 = arith.constant dense<0.000000e+00> : vector<8x128xf32>
    %129 = tpu.matmul %127, %128, %cst_41 {dimension_numbers = #tpu.dot_dimension_numbers<[1], [0], [0], [1], [0, 0, 1, 1], [], []>} : vector<8x32xbf16>, vector<32x128xbf16>, vector<8x128xf32> -> vector<8x128xf32>
    %130 = vector.extract_strided_slice %126 {offsets = [0, 0], sizes = [8, 64], strides = [1, 1]} : vector<8x128xf32> to vector<8x64xf32>
    %131 = vector.extract_strided_slice %129 {offsets = [0, 0], sizes = [8, 64], strides = [1, 1]} : vector<8x128xf32> to vector<8x64xf32>
    %132 = arith.addf %130, %131 : vector<8x64xf32>
    %133 = arith.negf %132 : vector<8x64xf32>
    %134 = math.exp %133 : vector<8x64xf32>
    %cst_42 = arith.constant 1.000000e+00 : f32
    %135 = vector.broadcast %cst_42 : f32 to vector<8x64xf32>
    %136 = arith.addf %135, %134 : vector<8x64xf32>
    %137 = arith.divf %135, %136 : vector<8x64xf32>
    %138 = vector.extract_strided_slice %137 {offsets = [0, 0], sizes = [8, 32], strides = [1, 1]} : vector<8x64xf32> to vector<8x32xf32>
    %139 = vector.extract_strided_slice %137 {offsets = [0, 32], sizes = [8, 32], strides = [1, 1]} : vector<8x64xf32> to vector<8x32xf32>
    %140 = vector.extract_strided_slice %126 {offsets = [0, 64], sizes = [8, 32], strides = [1, 1]} : vector<8x128xf32> to vector<8x32xf32>
    %141 = vector.extract_strided_slice %129 {offsets = [0, 64], sizes = [8, 32], strides = [1, 1]} : vector<8x128xf32> to vector<8x32xf32>
    %142 = arith.addf %141, %9 : vector<8x32xf32>
    %143 = arith.mulf %138, %142 : vector<8x32xf32>
    %144 = arith.addf %140, %143 : vector<8x32xf32>
    %145 = math.tanh %144 : vector<8x32xf32>
    %cst_43 = arith.constant 1.000000e+00 : f32
    %146 = vector.broadcast %cst_43 : f32 to vector<8x32xf32>
    %147 = arith.subf %146, %139 : vector<8x32xf32>
    %148 = arith.mulf %147, %145 : vector<8x32xf32>
    %149 = arith.mulf %139, %122 : vector<8x32xf32>
    %150 = arith.addf %148, %149 : vector<8x32xf32>
    %c5_i32 = arith.constant 5 : i32
    %c8_i32_44 = arith.constant 8 : i32
    %151 = arith.muli %c5_i32, %c8_i32_44 : i32
    %152 = tpu.assume_multiple %151, 8 : i32
    %153 = arith.index_cast %152 : i32 to index
    %c0_45 = arith.constant 0 : index
    %154 = vector.load %arg8[%153, %c0_45] : memref<64x128xf32, #tpu.memory_space<vmem>>, vector<8x128xf32>
    %155 = arith.truncf %150 : vector<8x32xf32> to vector<8x32xbf16>
    %c0_46 = arith.constant 0 : index
    %c0_47 = arith.constant 0 : index
    %156 = vector.load %arg2[%c0_46, %c0_47] : memref<32x128xbf16, #tpu.memory_space<vmem>>, vector<32x128xbf16>
    %cst_48 = arith.constant dense<0.000000e+00> : vector<8x128xf32>
    %157 = tpu.matmul %155, %156, %cst_48 {dimension_numbers = #tpu.dot_dimension_numbers<[1], [0], [0], [1], [0, 0, 1, 1], [], []>} : vector<8x32xbf16>, vector<32x128xbf16>, vector<8x128xf32> -> vector<8x128xf32>
    %158 = vector.extract_strided_slice %154 {offsets = [0, 0], sizes = [8, 64], strides = [1, 1]} : vector<8x128xf32> to vector<8x64xf32>
    %159 = vector.extract_strided_slice %157 {offsets = [0, 0], sizes = [8, 64], strides = [1, 1]} : vector<8x128xf32> to vector<8x64xf32>
    %160 = arith.addf %158, %159 : vector<8x64xf32>
    %161 = arith.negf %160 : vector<8x64xf32>
    %162 = math.exp %161 : vector<8x64xf32>
    %cst_49 = arith.constant 1.000000e+00 : f32
    %163 = vector.broadcast %cst_49 : f32 to vector<8x64xf32>
    %164 = arith.addf %163, %162 : vector<8x64xf32>
    %165 = arith.divf %163, %164 : vector<8x64xf32>
    %166 = vector.extract_strided_slice %165 {offsets = [0, 0], sizes = [8, 32], strides = [1, 1]} : vector<8x64xf32> to vector<8x32xf32>
    %167 = vector.extract_strided_slice %165 {offsets = [0, 32], sizes = [8, 32], strides = [1, 1]} : vector<8x64xf32> to vector<8x32xf32>
    %168 = vector.extract_strided_slice %154 {offsets = [0, 64], sizes = [8, 32], strides = [1, 1]} : vector<8x128xf32> to vector<8x32xf32>
    %169 = vector.extract_strided_slice %157 {offsets = [0, 64], sizes = [8, 32], strides = [1, 1]} : vector<8x128xf32> to vector<8x32xf32>
    %170 = arith.addf %169, %9 : vector<8x32xf32>
    %171 = arith.mulf %166, %170 : vector<8x32xf32>
    %172 = arith.addf %168, %171 : vector<8x32xf32>
    %173 = math.tanh %172 : vector<8x32xf32>
    %cst_50 = arith.constant 1.000000e+00 : f32
    %174 = vector.broadcast %cst_50 : f32 to vector<8x32xf32>
    %175 = arith.subf %174, %167 : vector<8x32xf32>
    %176 = arith.mulf %175, %173 : vector<8x32xf32>
    %177 = arith.mulf %167, %150 : vector<8x32xf32>
    %178 = arith.addf %176, %177 : vector<8x32xf32>
    %c6_i32 = arith.constant 6 : i32
    %c8_i32_51 = arith.constant 8 : i32
    %179 = arith.muli %c6_i32, %c8_i32_51 : i32
    %180 = tpu.assume_multiple %179, 8 : i32
    %181 = arith.index_cast %180 : i32 to index
    %c0_52 = arith.constant 0 : index
    %182 = vector.load %arg8[%181, %c0_52] : memref<64x128xf32, #tpu.memory_space<vmem>>, vector<8x128xf32>
    %183 = arith.truncf %178 : vector<8x32xf32> to vector<8x32xbf16>
    %c0_53 = arith.constant 0 : index
    %c0_54 = arith.constant 0 : index
    %184 = vector.load %arg2[%c0_53, %c0_54] : memref<32x128xbf16, #tpu.memory_space<vmem>>, vector<32x128xbf16>
    %cst_55 = arith.constant dense<0.000000e+00> : vector<8x128xf32>
    %185 = tpu.matmul %183, %184, %cst_55 {dimension_numbers = #tpu.dot_dimension_numbers<[1], [0], [0], [1], [0, 0, 1, 1], [], []>} : vector<8x32xbf16>, vector<32x128xbf16>, vector<8x128xf32> -> vector<8x128xf32>
    %186 = vector.extract_strided_slice %182 {offsets = [0, 0], sizes = [8, 64], strides = [1, 1]} : vector<8x128xf32> to vector<8x64xf32>
    %187 = vector.extract_strided_slice %185 {offsets = [0, 0], sizes = [8, 64], strides = [1, 1]} : vector<8x128xf32> to vector<8x64xf32>
    %188 = arith.addf %186, %187 : vector<8x64xf32>
    %189 = arith.negf %188 : vector<8x64xf32>
    %190 = math.exp %189 : vector<8x64xf32>
    %cst_56 = arith.constant 1.000000e+00 : f32
    %191 = vector.broadcast %cst_56 : f32 to vector<8x64xf32>
    %192 = arith.addf %191, %190 : vector<8x64xf32>
    %193 = arith.divf %191, %192 : vector<8x64xf32>
    %194 = vector.extract_strided_slice %193 {offsets = [0, 0], sizes = [8, 32], strides = [1, 1]} : vector<8x64xf32> to vector<8x32xf32>
    %195 = vector.extract_strided_slice %193 {offsets = [0, 32], sizes = [8, 32], strides = [1, 1]} : vector<8x64xf32> to vector<8x32xf32>
    %196 = vector.extract_strided_slice %182 {offsets = [0, 64], sizes = [8, 32], strides = [1, 1]} : vector<8x128xf32> to vector<8x32xf32>
    %197 = vector.extract_strided_slice %185 {offsets = [0, 64], sizes = [8, 32], strides = [1, 1]} : vector<8x128xf32> to vector<8x32xf32>
    %198 = arith.addf %197, %9 : vector<8x32xf32>
    %199 = arith.mulf %194, %198 : vector<8x32xf32>
    %200 = arith.addf %196, %199 : vector<8x32xf32>
    %201 = math.tanh %200 : vector<8x32xf32>
    %cst_57 = arith.constant 1.000000e+00 : f32
    %202 = vector.broadcast %cst_57 : f32 to vector<8x32xf32>
    %203 = arith.subf %202, %195 : vector<8x32xf32>
    %204 = arith.mulf %203, %201 : vector<8x32xf32>
    %205 = arith.mulf %195, %178 : vector<8x32xf32>
    %206 = arith.addf %204, %205 : vector<8x32xf32>
    %c7_i32 = arith.constant 7 : i32
    %c8_i32_58 = arith.constant 8 : i32
    %207 = arith.muli %c7_i32, %c8_i32_58 : i32
    %208 = tpu.assume_multiple %207, 8 : i32
    %209 = arith.index_cast %208 : i32 to index
    %c0_59 = arith.constant 0 : index
    %210 = vector.load %arg8[%209, %c0_59] : memref<64x128xf32, #tpu.memory_space<vmem>>, vector<8x128xf32>
    %211 = arith.truncf %206 : vector<8x32xf32> to vector<8x32xbf16>
    %c0_60 = arith.constant 0 : index
    %c0_61 = arith.constant 0 : index
    %212 = vector.load %arg2[%c0_60, %c0_61] : memref<32x128xbf16, #tpu.memory_space<vmem>>, vector<32x128xbf16>
    %cst_62 = arith.constant dense<0.000000e+00> : vector<8x128xf32>
    %213 = tpu.matmul %211, %212, %cst_62 {dimension_numbers = #tpu.dot_dimension_numbers<[1], [0], [0], [1], [0, 0, 1, 1], [], []>} : vector<8x32xbf16>, vector<32x128xbf16>, vector<8x128xf32> -> vector<8x128xf32>
    %214 = vector.extract_strided_slice %210 {offsets = [0, 0], sizes = [8, 64], strides = [1, 1]} : vector<8x128xf32> to vector<8x64xf32>
    %215 = vector.extract_strided_slice %213 {offsets = [0, 0], sizes = [8, 64], strides = [1, 1]} : vector<8x128xf32> to vector<8x64xf32>
    %216 = arith.addf %214, %215 : vector<8x64xf32>
    %217 = arith.negf %216 : vector<8x64xf32>
    %218 = math.exp %217 : vector<8x64xf32>
    %cst_63 = arith.constant 1.000000e+00 : f32
    %219 = vector.broadcast %cst_63 : f32 to vector<8x64xf32>
    %220 = arith.addf %219, %218 : vector<8x64xf32>
    %221 = arith.divf %219, %220 : vector<8x64xf32>
    %222 = vector.extract_strided_slice %221 {offsets = [0, 0], sizes = [8, 32], strides = [1, 1]} : vector<8x64xf32> to vector<8x32xf32>
    %223 = vector.extract_strided_slice %221 {offsets = [0, 32], sizes = [8, 32], strides = [1, 1]} : vector<8x64xf32> to vector<8x32xf32>
    %224 = vector.extract_strided_slice %210 {offsets = [0, 64], sizes = [8, 32], strides = [1, 1]} : vector<8x128xf32> to vector<8x32xf32>
    %225 = vector.extract_strided_slice %213 {offsets = [0, 64], sizes = [8, 32], strides = [1, 1]} : vector<8x128xf32> to vector<8x32xf32>
    %226 = arith.addf %225, %9 : vector<8x32xf32>
    %227 = arith.mulf %222, %226 : vector<8x32xf32>
    %228 = arith.addf %224, %227 : vector<8x32xf32>
    %229 = math.tanh %228 : vector<8x32xf32>
    %cst_64 = arith.constant 1.000000e+00 : f32
    %230 = vector.broadcast %cst_64 : f32 to vector<8x32xf32>
    %231 = arith.subf %230, %223 : vector<8x32xf32>
    %232 = arith.mulf %231, %229 : vector<8x32xf32>
    %233 = arith.mulf %223, %206 : vector<8x32xf32>
    %234 = arith.addf %232, %233 : vector<8x32xf32>
    %c8_i32_65 = arith.constant 8 : i32
    %c0_66 = arith.constant 0 : index
    %c0_67 = arith.constant 0 : index
    %235 = vector.load %arg5[%c0_66, %c0_67] : memref<32x128xf32, #tpu.memory_space<vmem>>, vector<32x128xf32>
    %cst_68 = arith.constant dense<0.000000e+00> : vector<8x128xf32>
    %236 = tpu.matmul %234, %235, %cst_68 {dimension_numbers = #tpu.dot_dimension_numbers<[1], [0], [0], [1], [0, 0, 1, 1], [], []>} : vector<8x32xf32>, vector<32x128xf32>, vector<8x128xf32> -> vector<8x128xf32>
    %c0_69 = arith.constant 0 : index
    %c0_70 = arith.constant 0 : index
    %237 = vector.load %arg6[%c0_69, %c0_70] : memref<1x128xf32, #tpu.memory_space<vmem>>, vector<1x128xf32>
    %238 = vector.broadcast %237 : vector<1x128xf32> to vector<8x128xf32>
    %239 = arith.addf %236, %238 : vector<8x128xf32>
    %c0_71 = arith.constant 0 : index
    %c0_72 = arith.constant 0 : index
    %240 = vector.load %arg7[%c0_71, %c0_72] : memref<8x128xf32, #tpu.memory_space<vmem>>, vector<8x128xf32>
    tpu.vector_store %arg7[%c0_71, %c0_72], %239 {strides = array<i32>} : memref<8x128xf32, #tpu.memory_space<vmem>>, vector<8x128xf32>,
    return
  }
}

</mosaic_0001>

<llo_original>
// kernel: tpu_custom_call.1
$region0: #{tpu_custom_call.1}
  #allocation0 [shape = 'u32[]', space=smem, size = 0x4, offset = 0x4, fixed_abs, tag = 'smem constant byte address 0x4 - core index']
  #allocation1 [shape = 'u32[144,128]{1,0:T(1,128)}', space=vmem, size = 0x12000, scoped, tag = 'internal scratch']
  #allocation2 [shape = 'f32[64,128]{1,0:T(8,128)}', space=vmem, size = 0x8000, scoped, tag = 'scratch operand']
  %s0 = inlined_call_operand.vmem [shape: f32[64,16], index: 0, kind: input, shape index: {}]
  %s1 = inlined_call_operand.vmem [shape: f32[16,128], index: 1, kind: input, shape index: {}]
  %s2 = inlined_call_operand.vmem [shape: bf16[32,128], index: 2, kind: input, shape index: {}]
  %s3 = inlined_call_operand.vmem [shape: f32[1,128], index: 3, kind: input, shape index: {}]
  %s4 = inlined_call_operand.vmem [shape: f32[1,32], index: 4, kind: input, shape index: {}]
  %s5 = inlined_call_operand.vmem [shape: f32[32,128], index: 5, kind: input, shape index: {}]
  %s6 = inlined_call_operand.vmem [shape: f32[1,128], index: 6, kind: input, shape index: {}]
  %s7 = inlined_call_operand.hbm [shape: f32[8,128], index: 7, kind: output, shape index: {}]
  %s8 = sld [smem:[#allocation0]]
  $region38: #{tpu_custom_call.1} parent=0
    _
  %s10 = ssub.s32 1, %s8
  %s11 = scalar_select 0, %s10, %s8
  $region1: #{tpu_custom_call.1} parent=0
    #allocation3 [shape = 'u8[4096]{0}', space=vmem, size = 0x1000, scoped, tag = 'output window, operand 0, single buffered']
    #allocation4 [shape = 's32[1]{0}', space=sflag, size = 0x4, scoped, tag = 'scoped memory for tpu_custom_call.1']
    %12 = vsyncpa [#allocation4], 0
    // Predicated region
    $region2: #{tpu_custom_call.1} parent=1 // pred_check
      _
    $region3: #{tpu_custom_call.1} parent=1 // pred_check_branch
      %14 = sbr.rel (0) target = $region5
    $region4: #{tpu_custom_call.1} parent=1 // pred_region
      _
    $region5: #{tpu_custom_call.1} parent=1 // pred_fallthru
      _
    // Predicated region
    $region6: #{tpu_custom_call.1} parent=1 // pred_check
      _
    $region7: #{tpu_custom_call.1} parent=1 // pred_check_branch
      %16 = sbr.rel (0) target = $region9
    $region8: #{tpu_custom_call.1} parent=1 // pred_region
      _
    $region9: #{tpu_custom_call.1} parent=1 // pred_fallthru
      _
    // Predicated region
    $region10: #{tpu_custom_call.1} parent=1 // pred_check
      _
    $region11: #{tpu_custom_call.1} parent=1 // pred_check_branch
      %18 = sbr.rel (0) target = $region13
    $region12: #{tpu_custom_call.1} parent=1 // pred_region
      _
    $region13: #{tpu_custom_call.1} parent=1 // pred_fallthru
      _
    // Predicated region
    $region14: #{tpu_custom_call.1} parent=1 // pred_check
      _
    $region15: #{tpu_custom_call.1} parent=1 // pred_check_branch
      %20 = sbr.rel (0) target = $region17
    $region16: #{tpu_custom_call.1} parent=1 // pred_region
      _
    $region17: #{tpu_custom_call.1} parent=1 // pred_fallthru
      _
    // Predicated region
    $region18: #{tpu_custom_call.1} parent=1 // pred_check
      _
    $region19: #{tpu_custom_call.1} parent=1 // pred_check_branch
      %22 = sbr.rel (0) target = $region21
    $region20: #{tpu_custom_call.1} parent=1 // pred_region
      _
    $region21: #{tpu_custom_call.1} parent=1 // pred_fallthru
      _
    // Predicated region
    $region22: #{tpu_custom_call.1} parent=1 // pred_check
      _
    $region23: #{tpu_custom_call.1} parent=1 // pred_check_branch
      %24 = sbr.rel (0) target = $region25
    $region24: #{tpu_custom_call.1} parent=1 // pred_region
      _
    $region25: #{tpu_custom_call.1} parent=1 // pred_fallthru
      _
    // Predicated region
    $region26: #{tpu_custom_call.1} parent=1 // pred_check
      _
    $region27: #{tpu_custom_call.1} parent=1 // pred_check_branch
      %26 = sbr.rel (0) target = $region29
    $region28: #{tpu_custom_call.1} parent=1 // pred_region
      _
    $region29: #{tpu_custom_call.1} parent=1 // pred_fallthru
      _
    %v28 = vld [vmem:[%s0] sm:$0xff]
    %v29 = vld [vmem:[%s0 + $0x8] sm:$0xff]
    %v30 = vld [vmem:[%s0 + $0x10] sm:$0xff]
    %v31 = vld [vmem:[%s0 + $0x18] sm:$0xff]
    %v32 = vld [vmem:[%s0 + $0x20] sm:$0xff]
    %v33 = vld [vmem:[%s0 + $0x28] sm:$0xff]
    %v34 = vld [vmem:[%s0 + $0x30] sm:$0xff]
    %v35 = vld [vmem:[%s0 + $0x38] sm:$0xff]
    %v36 = vld [vmem:[%s1] sm:$0xff]
    %v37 = vld [vmem:[%s1 + $0x8] sm:$0xff]
    %v38 = vld [vmem:[%s3] sm:$0x1]
    %v40 = vlaneseq
    %v41 = vshrl.u32 %v40, 7
    %v42 = vsub.s32 0, %v41
    %v43 = vrot.slane %v38, %v42
    %vm45 = vcmask 130048
    %v47 = vsel %vm45, %v28, 0
    %v50 = vsel %vm45, %v29, 0
    %v53 = vsel %vm45, %v30, 0
    %v56 = vsel %vm45, %v31, 0
    %v59 = vsel %vm45, %v32, 0
    %v62 = vsel %vm45, %v33, 0
    %v65 = vsel %vm45, %v34, 0
    %v68 = vsel %vm45, %v35, 0
    %70 = vmatprep.subr.mxu0 0.0
    %71 = vmatpush1.msra.mxu0 %v36
    %72 = vmatprep.subr.mxu0 0.0
    %73 = vmatpush1.msra.mxu0 %v37
    %74 = vmatprep.subr.mxu0 0.0
    %75 = vmatpush1.msra.mxu0 0.0
    %76 = vmatprep.subr.mxu0 0.0
    %77 = vmatpush1.msra.mxu0 0.0
    %78 = vmatprep.subr.mxu0 0.0
    %79 = vmatpush1.msra.mxu0 0.0
    %80 = vmatprep.subr.mxu0 0.0
    %81 = vmatpush1.msra.mxu0 0.0
    %82 = vmatprep.subr.mxu0 0.0
    %83 = vmatpush1.msra.mxu0 0.0
    %84 = vmatprep.subr.mxu0 0.0
    %85 = vmatpush1.msra.mxu0 0.0
    %86 = vmatprep.subr.mxu0 0.0
    %87 = vmatpush1.msra.mxu0 0.0
    %88 = vmatprep.subr.mxu0 0.0
    %89 = vmatpush1.msra.mxu0 0.0
    %90 = vmatprep.subr.mxu0 0.0
    %91 = vmatpush1.msra.mxu0 0.0
    %92 = vmatprep.subr.mxu0 0.0
    %93 = vmatpush1.msra.mxu0 0.0
    %94 = vmatprep.subr.mxu0 0.0
    %95 = vmatpush1.msra.mxu0 0.0
    %96 = vmatprep.subr.mxu0 0.0
    %97 = vmatpush1.msra.mxu0 0.0
    %98 = vmatprep.subr.mxu0 0.0
    %99 = vmatpush1.msra.mxu0 0.0
    %100 = vmatprep.subr.mxu0 0.0
    %101 = vmatpush1.msra.mxu0 0.0
    %102 = vmatprep.subr.mxu0 0.0
    %103 = vmatpush1.msra.mxu0 0.0
    %104 = vmatprep.subr.mxu0 0.0
    %105 = vmatpush1.msra.mxu0 0.0
    %106 = vmatprep.subr.mxu0 0.0
    %107 = vmatpush1.msra.mxu0 0.0
    %108 = vmatprep.subr.mxu0 0.0
    %109 = vmatpush1.msra.mxu0 0.0
    %110 = vmatprep.subr.mxu0 0.0
    %111 = vmatpush1.msra.mxu0 0.0
    %112 = vmatprep.subr.mxu0 0.0
    %113 = vmatpush1.msra.mxu0 0.0
    %114 = vmatprep.subr.mxu0 0.0
    %115 = vmatpush1.msra.mxu0 0.0
    %116 = vmatprep.subr.mxu0 0.0
    %117 = vmatpush1.msra.mxu0 0.0
    %118 = vmatprep.subr.mxu0 0.0
    %119 = vmatpush1.msra.mxu0 0.0
    %120 = vmatprep.subr.mxu0 0.0
    %121 = vmatpush1.msra.mxu0 0.0
    %122 = vmatprep.subr.mxu0 0.0
    %123 = vmatpush1.msra.mxu0 0.0
    %124 = vmatprep.subr.mxu0 0.0
    %125 = vmatpush1.msra.mxu0 0.0
    %126 = vmatprep.subr.mxu0 0.0
    %127 = vmatpush1.msra.mxu0 0.0
    %128 = vmatprep.subr.mxu0 0.0
    %129 = vmatpush1.msra.mxu0 0.0
    %130 = vmatprep.subr.mxu0 0.0
    %131 = vmatpush1.msra.mxu0 0.0
    %132 = vmatprep.subr.mxu0 0.0
    %133 = vmatpush1.msra.mxu0 0.0
    %134 = vmatprep.mubr.f32.mxu0 0.0
    %135 = vmatmul.mubr.f32.gmra.mrb[0].mxu0 %v47
    %v136 = vpop.f32.mrb[0].mxu0
    %v137 = vadd.f32 %v43, %v136
    %v138 = vpop.f32.mrb[0].mxu0
    %139 = vmatprep.mubr.f32.mxu0 0.0
    %140 = vmatmul.mubr.f32.gmra.mrb[0].mxu0 %v50
    %v141 = vpop.f32.mrb[0].mxu0
    %v142 = vadd.f32 %v43, %v141
    %v143 = vpop.f32.mrb[0].mxu0
    %144 = vmatprep.mubr.f32.mxu0 0.0
    %145 = vmatmul.mubr.f32.gmra.mrb[0].mxu0 %v53
    %v146 = vpop.f32.mrb[0].mxu0
    %v147 = vadd.f32 %v43, %v146
    %v148 = vpop.f32.mrb[0].mxu0
    %149 = vmatprep.mubr.f32.mxu0 0.0
    %150 = vmatmul.mubr.f32.gmra.mrb[0].mxu0 %v56
    %v151 = vpop.f32.mrb[0].mxu0
    %v152 = vadd.f32 %v43, %v151
    %v153 = vpop.f32.mrb[0].mxu0
    %154 = vmatprep.mubr.f32.mxu0 0.0
    %155 = vmatmul.mubr.f32.gmra.mrb[0].mxu0 %v59
    %v156 = vpop.f32.mrb[0].mxu0
    %v157 = vadd.f32 %v43, %v156
    %v158 = vpop.f32.mrb[0].mxu0
    %159 = vmatprep.mubr.f32.mxu0 0.0
    %160 = vmatmul.mubr.f32.gmra.mrb[0].mxu0 %v62
    %v161 = vpop.f32.mrb[0].mxu0
    %v162 = vadd.f32 %v43, %v161
    %v163 = vpop.f32.mrb[0].mxu0
    %164 = vmatprep.mubr.f32.mxu0 0.0
    %165 = vmatmul.mubr.f32.gmra.mrb[0].mxu0 %v65
    %v166 = vpop.f32.mrb[0].mxu0
    %v167 = vadd.f32 %v43, %v166
    %v168 = vpop.f32.mrb[0].mxu0
    %169 = vmatprep.mubr.f32.mxu0 0.0
    %170 = vmatmul.mubr.f32.gmra.mrb[0].mxu0 %v68
    %v171 = vpop.f32.mrb[0].mxu0
    %v172 = vadd.f32 %v43, %v171
    %v173 = vpop.f32.mrb[0].mxu0
    %174 = vdwg.mxu0
    %175 = vst [vmem:[#allocation2] sm:$0xff] %v137
    %176 = vst [vmem:[#allocation2 + $0x8] sm:$0xff] %v142
    %177 = vst [vmem:[#allocation2 + $0x10] sm:$0xff] %v147
    %178 = vst [vmem:[#allocation2 + $0x18] sm:$0xff] %v152
    %179 = vst [vmem:[#allocation2 + $0x20] sm:$0xff] %v157
    %180 = vst [vmem:[#allocation2 + $0x28] sm:$0xff] %v162
    %181 = vst [vmem:[#allocation2 + $0x30] sm:$0xff] %v167
    %182 = vst [vmem:[#allocation2 + $0x38] sm:$0xff] %v172
    %v183 = vld [vmem:[%s4] sm:$0x1]
    %v185 = vlaneseq
    %v186 = vshrl.u32 %v185, 7
    %v187 = vsub.s32 0, %v186
    %v188 = vrot.slane %v183, %v187
    %v189 = vld [vmem:[#allocation2] sm:$0xff]
    %v190 = vld [vmem:[%s2] sm:$0xf]
    %v191 = vld [vmem:[%s2 + $0x4] sm:$0xf]
    %v192 = vld [vmem:[%s2 + $0x8] sm:$0xf]
    %v193 = vld [vmem:[%s2 + $0xc] sm:$0xf]
    %v198 = vunpack.c.l.b16 %v190
    %v199 = vunpack.c.l.b16 %v191
    %v200 = vunpack.c.l.b16 %v192
    %v201 = vunpack.c.l.b16 %v193
    %v202 = vpack.c.b16 %v199, %v198
    %v203 = vpack.c.b16 %v201, %v200
    %vm206 = vcmask 261120
    %v208 = vsel %vm206, 0, 0
    %210 = vmatprep.subr.bf16.mxu0 0
    %211 = vmatpush1.bf16.msra.mxu0 %v202
    %212 = vmatprep.subr.bf16.mxu0 0
    %213 = vmatpush1.bf16.msra.mxu0 %v203
    %214 = vmatprep.subr.bf16.mxu0 0
    %215 = vmatpush1.bf16.msra.mxu0 0
    %216 = vmatprep.subr.bf16.mxu0 0
    %217 = vmatpush1.bf16.msra.mxu0 0
    %218 = vmatprep.subr.bf16.mxu0 0
    %219 = vmatpush1.bf16.msra.mxu0 0
    %220 = vmatprep.subr.bf16.mxu0 0
    %221 = vmatpush1.bf16.msra.mxu0 0
    %222 = vmatprep.subr.bf16.mxu0 0
    %223 = vmatpush1.bf16.msra.mxu0 0
    %224 = vmatprep.subr.bf16.mxu0 0
    %225 = vmatpush1.bf16.msra.mxu0 0
    %226 = vmatprep.subr.bf16.mxu0 0
    %227 = vmatpush1.bf16.msra.mxu0 0
    %228 = vmatprep.subr.bf16.mxu0 0
    %229 = vmatpush1.bf16.msra.mxu0 0
    %230 = vmatprep.subr.bf16.mxu0 0
    %231 = vmatpush1.bf16.msra.mxu0 0
    %232 = vmatprep.subr.bf16.mxu0 0
    %233 = vmatpush1.bf16.msra.mxu0 0
    %234 = vmatprep.subr.bf16.mxu0 0
    %235 = vmatpush1.bf16.msra.mxu0 0
    %236 = vmatprep.subr.bf16.mxu0 0
    %237 = vmatpush1.bf16.msra.mxu0 0
    %238 = vmatprep.subr.bf16.mxu0 0
    %239 = vmatpush1.bf16.msra.mxu0 0
    %240 = vmatprep.subr.bf16.mxu0 0
    %241 = vmatpush1.bf16.msra.mxu0 0
    %242 = vmatprep.mubr.bf16.mxu0 0
    %243 = vmatmul.mubr.bf16.gmra.mrb[0].mxu0 %v208
    %v244 = vpop.f32.mrb[0].mxu0
    %v245 = vadd.f32 0.0, %v244
    %v246 = vpop.f32.mrb[0].mxu0
    %v247 = vpop.f32.mrb[0].mxu0
    %v248 = vpop.f32.mrb[0].mxu0
    %249 = vdwg.mxu0
    %v250 = vadd.f32 %v189, %v245
    %v251 = vxor.u32 %v250, 2147483648
    %v252 = vmul.f32 %v251, 1.442695
    %v253 = vpow.pop %v252
    %v254 = vadd.f32 %v253, 1.0
    %v255 = vrcp.pop %v254
    %v256 = vmul.f32 1.0, %v255
    %257 = vrot.lane.b32.xlu0 %v188, 64
    %v258 = vpop.permute.xlu0 %257
    %v260 = vadd.f32 %v245, %v258
    %262 = vrot.lane.b32.xlu0 %v260, 64
    %v263 = vpop.permute.xlu0 %262
    %v265 = vmul.f32 %v256, %v263
    %267 = vrot.lane.b32.xlu0 %v265, 64
    %v268 = vpop.permute.xlu0 %267
    %v270 = vadd.f32 %v189, %v268
    %v271 = vtanh.pop %v270
    %v272 = vsub.f32 1.0, %v256
    %274 = vrot.lane.b32.xlu0 %v271, 96
    %v275 = vpop.permute.xlu0 %274
    %v277 = vmul.f32 %v272, %v275
    %v278 = vmul.f32 %v256, 0.0
    %v279 = vadd.f32 %v277, %v278
    %s280 = scalar_lea.vmem [#allocation2], 8
    %v281 = vld [vmem:[%s280] sm:$0xff]
    %v282 = vpack.c.bf16 %v279, %v279
    %284 = vrot.lane.b32.xlu0 %v282, 96
    %v285 = vpop.permute.xlu0 %284
    %v287 = vsel %vm206, %v285, 0
    %289 = vmatprep.subr.bf16.mxu0 0
    %290 = vmatpush1.bf16.msra.mxu0 %v202
    %291 = vmatprep.subr.bf16.mxu0 0
    %292 = vmatpush1.bf16.msra.mxu0 %v203
    %293 = vmatprep.subr.bf16.mxu0 0
    %294 = vmatpush1.bf16.msra.mxu0 0
    %295 = vmatprep.subr.bf16.mxu0 0
    %296 = vmatpush1.bf16.msra.mxu0 0
    %297 = vmatprep.subr.bf16.mxu0 0
    %298 = vmatpush1.bf16.msra.mxu0 0
    %299 = vmatprep.subr.bf16.mxu0 0
    %300 = vmatpush1.bf16.msra.mxu0 0
    %301 = vmatprep.subr.bf16.mxu0 0
    %302 = vmatpush1.bf16.msra.mxu0 0
    %303 = vmatprep.subr.bf16.mxu0 0
    %304 = vmatpush1.bf16.msra.mxu0 0
    %305 = vmatprep.subr.bf16.mxu0 0
    %306 = vmatpush1.bf16.msra.mxu0 0
    %307 = vmatprep.subr.bf16.mxu0 0
    %308 = vmatpush1.bf16.msra.mxu0 0
    %309 = vmatprep.subr.bf16.mxu0 0
    %310 = vmatpush1.bf16.msra.mxu0 0
    %311 = vmatprep.subr.bf16.mxu0 0
    %312 = vmatpush1.bf16.msra.mxu0 0
    %313 = vmatprep.subr.bf16.mxu0 0
    %314 = vmatpush1.bf16.msra.mxu0 0
    %315 = vmatprep.subr.bf16.mxu0 0
    %316 = vmatpush1.bf16.msra.mxu0 0
    %317 = vmatprep.subr.bf16.mxu0 0
    %318 = vmatpush1.bf16.msra.mxu0 0
    %319 = vmatprep.subr.bf16.mxu0 0
    %320 = vmatpush1.bf16.msra.mxu0 0
    %321 = vmatprep.mubr.bf16.mxu0 0
    %322 = vmatmul.mubr.bf16.gmra.mrb[0].mxu0 %v287
    %v323 = vpop.f32.mrb[0].mxu0
    %v324 = vadd.f32 0.0, %v323
    %v325 = vpop.f32.mrb[0].mxu0
    %v326 = vpop.f32.mrb[0].mxu0
    %v327 = vpop.f32.mrb[0].mxu0
    %328 = vdwg.mxu0
    %v329 = vadd.f32 %v281, %v324
    %v330 = vxor.u32 %v329, 2147483648
    %v331 = vmul.f32 %v330, 1.442695
    %v332 = vpow.pop %v331
    %v333 = vadd.f32 %v332, 1.0
    %v334 = vrcp.pop %v333
    %v335 = vmul.f32 1.0, %v334
    %v336 = vadd.f32 %v324, %v258
    %338 = vrot.lane.b32.xlu0 %v336, 64
    %v339 = vpop.permute.xlu0 %338
    %v341 = vmul.f32 %v335, %v339
    %343 = vrot.lane.b32.xlu0 %v341, 64
    %v344 = vpop.permute.xlu0 %343
    %v346 = vadd.f32 %v281, %v344
    %v347 = vtanh.pop %v346
    %v348 = vsub.f32 1.0, %v335
    %350 = vrot.lane.b32.xlu0 %v347, 96
    %v351 = vpop.permute.xlu0 %350
    %v353 = vmul.f32 %v348, %v351
    %v354 = vmul.f32 %v335, %v279
    %v355 = vadd.f32 %v353, %v354
    %s356 = scalar_lea.vmem [#allocation2], 16
    %v357 = vld [vmem:[%s356] sm:$0xff]
    %v358 = vpack.c.bf16 %v355, %v355
    %360 = vrot.lane.b32.xlu0 %v358, 96
    %v361 = vpop.permute.xlu0 %360
    %v363 = vsel %vm206, %v361, 0
    %365 = vmatprep.subr.bf16.mxu0 0
    %366 = vmatpush1.bf16.msra.mxu0 %v202
    %367 = vmatprep.subr.bf16.mxu0 0
    %368 = vmatpush1.bf16.msra.mxu0 %v203
    %369 = vmatprep.subr.bf16.mxu0 0
    %370 = vmatpush1.bf16.msra.mxu0 0
    %371 = vmatprep.subr.bf16.mxu0 0
    %372 = vmatpush1.bf16.msra.mxu0 0
    %373 = vmatprep.subr.bf16.mxu0 0
    %374 = vmatpush1.bf16.msra.mxu0 0
    %375 = vmatprep.subr.bf16.mxu0 0
    %376 = vmatpush1.bf16.msra.mxu0 0
    %377 = vmatprep.subr.bf16.mxu0 0
    %378 = vmatpush1.bf16.msra.mxu0 0
    %379 = vmatprep.subr.bf16.mxu0 0
    %380 = vmatpush1.bf16.msra.mxu0 0
    %381 = vmatprep.subr.bf16.mxu0 0
    %382 = vmatpush1.bf16.msra.mxu0 0
    %383 = vmatprep.subr.bf16.mxu0 0
    %384 = vmatpush1.bf16.msra.mxu0 0
    %385 = vmatprep.subr.bf16.mxu0 0
    %386 = vmatpush1.bf16.msra.mxu0 0
    %387 = vmatprep.subr.bf16.mxu0 0
    %388 = vmatpush1.bf16.msra.mxu0 0
    %389 = vmatprep.subr.bf16.mxu0 0
    %390 = vmatpush1.bf16.msra.mxu0 0
    %391 = vmatprep.subr.bf16.mxu0 0
    %392 = vmatpush1.bf16.msra.mxu0 0
    %393 = vmatprep.subr.bf16.mxu0 0
    %394 = vmatpush1.bf16.msra.mxu0 0
    %395 = vmatprep.subr.bf16.mxu0 0
    %396 = vmatpush1.bf16.msra.mxu0 0
    %397 = vmatprep.mubr.bf16.mxu0 0
    %398 = vmatmul.mubr.bf16.gmra.mrb[0].mxu0 %v363
    %v399 = vpop.f32.mrb[0].mxu0
    %v400 = vadd.f32 0.0, %v399
    %v401 = vpop.f32.mrb[0].mxu0
    %v402 = vpop.f32.mrb[0].mxu0
    %v403 = vpop.f32.mrb[0].mxu0
    %404 = vdwg.mxu0
    %v405 = vadd.f32 %v357, %v400
    %v406 = vxor.u32 %v405, 2147483648
    %v407 = vmul.f32 %v406, 1.442695
    %v408 = vpow.pop %v407
    %v409 = vadd.f32 %v408, 1.0
    %v410 = vrcp.pop %v409
    %v411 = vmul.f32 1.0, %v410
    %v412 = vadd.f32 %v400, %v258
    %414 = vrot.lane.b32.xlu0 %v412, 64
    %v415 = vpop.permute.xlu0 %414
    %v417 = vmul.f32 %v411, %v415
    %419 = vrot.lane.b32.xlu0 %v417, 64
    %v420 = vpop.permute.xlu0 %419
    %v422 = vadd.f32 %v357, %v420
    %v423 = vtanh.pop %v422
    %v424 = vsub.f32 1.0, %v411
    %426 = vrot.lane.b32.xlu0 %v423, 96
    %v427 = vpop.permute.xlu0 %426
    %v429 = vmul.f32 %v424, %v427
    %v430 = vmul.f32 %v411, %v355
    %v431 = vadd.f32 %v429, %v430
    %s432 = scalar_lea.vmem [#allocation2], 24
    %v433 = vld [vmem:[%s432] sm:$0xff]
    %v434 = vpack.c.bf16 %v431, %v431
    %436 = vrot.lane.b32.xlu0 %v434, 96
    %v437 = vpop.permute.xlu0 %436
    %v439 = vsel %vm206, %v437, 0
    %441 = vmatprep.subr.bf16.mxu0 0
    %442 = vmatpush1.bf16.msra.mxu0 %v202
    %443 = vmatprep.subr.bf16.mxu0 0
    %444 = vmatpush1.bf16.msra.mxu0 %v203
    %445 = vmatprep.subr.bf16.mxu0 0
    %446 = vmatpush1.bf16.msra.mxu0 0
    %447 = vmatprep.subr.bf16.mxu0 0
    %448 = vmatpush1.bf16.msra.mxu0 0
    %449 = vmatprep.subr.bf16.mxu0 0
    %450 = vmatpush1.bf16.msra.mxu0 0
    %451 = vmatprep.subr.bf16.mxu0 0
    %452 = vmatpush1.bf16.msra.mxu0 0
    %453 = vmatprep.subr.bf16.mxu0 0
    %454 = vmatpush1.bf16.msra.mxu0 0
    %455 = vmatprep.subr.bf16.mxu0 0
    %456 = vmatpush1.bf16.msra.mxu0 0
    %457 = vmatprep.subr.bf16.mxu0 0
    %458 = vmatpush1.bf16.msra.mxu0 0
    %459 = vmatprep.subr.bf16.mxu0 0
    %460 = vmatpush1.bf16.msra.mxu0 0
    %461 = vmatprep.subr.bf16.mxu0 0
    %462 = vmatpush1.bf16.msra.mxu0 0
    %463 = vmatprep.subr.bf16.mxu0 0
    %464 = vmatpush1.bf16.msra.mxu0 0
    %465 = vmatprep.subr.bf16.mxu0 0
    %466 = vmatpush1.bf16.msra.mxu0 0
    %467 = vmatprep.subr.bf16.mxu0 0
    %468 = vmatpush1.bf16.msra.mxu0 0
    %469 = vmatprep.subr.bf16.mxu0 0
    %470 = vmatpush1.bf16.msra.mxu0 0
    %471 = vmatprep.subr.bf16.mxu0 0
    %472 = vmatpush1.bf16.msra.mxu0 0
    %473 = vmatprep.mubr.bf16.mxu0 0
    %474 = vmatmul.mubr.bf16.gmra.mrb[0].mxu0 %v439
    %v475 = vpop.f32.mrb[0].mxu0
    %v476 = vadd.f32 0.0, %v475
    %v477 = vpop.f32.mrb[0].mxu0
    %v478 = vpop.f32.mrb[0].mxu0
    %v479 = vpop.f32.mrb[0].mxu0
    %480 = vdwg.mxu0
    %v481 = vadd.f32 %v433, %v476
    %v482 = vxor.u32 %v481, 2147483648
    %v483 = vmul.f32 %v482, 1.442695
    %v484 = vpow.pop %v483
    %v485 = vadd.f32 %v484, 1.0
    %v486 = vrcp.pop %v485
    %v487 = vmul.f32 1.0, %v486
    %v488 = vadd.f32 %v476, %v258
    %490 = vrot.lane.b32.xlu0 %v488, 64
    %v491 = vpop.permute.xlu0 %490
    %v493 = vmul.f32 %v487, %v491
    %495 = vrot.lane.b32.xlu0 %v493, 64
    %v496 = vpop.permute.xlu0 %495
    %v498 = vadd.f32 %v433, %v496
    %v499 = vtanh.pop %v498
    %v500 = vsub.f32 1.0, %v487
    %502 = vrot.lane.b32.xlu0 %v499, 96
    %v503 = vpop.permute.xlu0 %502
    %v505 = vmul.f32 %v500, %v503
    %v506 = vmul.f32 %v487, %v431
    %v507 = vadd.f32 %v505, %v506
    %s508 = scalar_lea.vmem [#allocation2], 32
    %v509 = vld [vmem:[%s508] sm:$0xff]
    %v510 = vpack.c.bf16 %v507, %v507
    %512 = vrot.lane.b32.xlu0 %v510, 96
    %v513 = vpop.permute.xlu0 %512
    %v515 = vsel %vm206, %v513, 0
    %517 = vmatprep.subr.bf16.mxu0 0
    %518 = vmatpush1.bf16.msra.mxu0 %v202
    %519 = vmatprep.subr.bf16.mxu0 0
    %520 = vmatpush1.bf16.msra.mxu0 %v203
    %521 = vmatprep.subr.bf16.mxu0 0
    %522 = vmatpush1.bf16.msra.mxu0 0
    %523 = vmatprep.subr.bf16.mxu0 0
    %524 = vmatpush1.bf16.msra.mxu0 0
    %525 = vmatprep.subr.bf16.mxu0 0
    %526 = vmatpush1.bf16.msra.mxu0 0
    %527 = vmatprep.subr.bf16.mxu0 0
    %528 = vmatpush1.bf16.msra.mxu0 0
    %529 = vmatprep.subr.bf16.mxu0 0
    %530 = vmatpush1.bf16.msra.mxu0 0
    %531 = vmatprep.subr.bf16.mxu0 0
    %532 = vmatpush1.bf16.msra.mxu0 0
    %533 = vmatprep.subr.bf16.mxu0 0
    %534 = vmatpush1.bf16.msra.mxu0 0
    %535 = vmatprep.subr.bf16.mxu0 0
    %536 = vmatpush1.bf16.msra.mxu0 0
    %537 = vmatprep.subr.bf16.mxu0 0
    %538 = vmatpush1.bf16.msra.mxu0 0
    %539 = vmatprep.subr.bf16.mxu0 0
    %540 = vmatpush1.bf16.msra.mxu0 0
    %541 = vmatprep.subr.bf16.mxu0 0
    %542 = vmatpush1.bf16.msra.mxu0 0
    %543 = vmatprep.subr.bf16.mxu0 0
    %544 = vmatpush1.bf16.msra.mxu0 0
    %545 = vmatprep.subr.bf16.mxu0 0
    %546 = vmatpush1.bf16.msra.mxu0 0
    %547 = vmatprep.subr.bf16.mxu0 0
    %548 = vmatpush1.bf16.msra.mxu0 0
    %549 = vmatprep.mubr.bf16.mxu0 0
    %550 = vmatmul.mubr.bf16.gmra.mrb[0].mxu0 %v515
    %v551 = vpop.f32.mrb[0].mxu0
    %v552 = vadd.f32 0.0, %v551
    %v553 = vpop.f32.mrb[0].mxu0
    %v554 = vpop.f32.mrb[0].mxu0
    %v555 = vpop.f32.mrb[0].mxu0
    %556 = vdwg.mxu0
    %v557 = vadd.f32 %v509, %v552
    %v558 = vxor.u32 %v557, 2147483648
    %v559 = vmul.f32 %v558, 1.442695
    %v560 = vpow.pop %v559
    %v561 = vadd.f32 %v560, 1.0
    %v562 = vrcp.pop %v561
    %v563 = vmul.f32 1.0, %v562
    %v564 = vadd.f32 %v552, %v258
    %566 = vrot.lane.b32.xlu0 %v564, 64
    %v567 = vpop.permute.xlu0 %566
    %v569 = vmul.f32 %v563, %v567
    %571 = vrot.lane.b32.xlu0 %v569, 64
    %v572 = vpop.permute.xlu0 %571
    %v574 = vadd.f32 %v509, %v572
    %v575 = vtanh.pop %v574
    %v576 = vsub.f32 1.0, %v563
    %578 = vrot.lane.b32.xlu0 %v575, 96
    %v579 = vpop.permute.xlu0 %578
    %v581 = vmul.f32 %v576, %v579
    %v582 = vmul.f32 %v563, %v507
    %v583 = vadd.f32 %v581, %v582
    %s584 = scalar_lea.vmem [#allocation2], 40
    %v585 = vld [vmem:[%s584] sm:$0xff]
    %v586 = vpack.c.bf16 %v583, %v583
    %588 = vrot.lane.b32.xlu0 %v586, 96
    %v589 = vpop.permute.xlu0 %588
    %v591 = vsel %vm206, %v589, 0
    %593 = vmatprep.subr.bf16.mxu0 0
    %594 = vmatpush1.bf16.msra.mxu0 %v202
    %595 = vmatprep.subr.bf16.mxu0 0
    %596 = vmatpush1.bf16.msra.mxu0 %v203
    %597 = vmatprep.subr.bf16.mxu0 0
    %598 = vmatpush1.bf16.msra.mxu0 0
    %599 = vmatprep.subr.bf16.mxu0 0
    %600 = vmatpush1.bf16.msra.mxu0 0
    %601 = vmatprep.subr.bf16.mxu0 0
    %602 = vmatpush1.bf16.msra.mxu0 0
    %603 = vmatprep.subr.bf16.mxu0 0
    %604 = vmatpush1.bf16.msra.mxu0 0
    %605 = vmatprep.subr.bf16.mxu0 0
    %606 = vmatpush1.bf16.msra.mxu0 0
    %607 = vmatprep.subr.bf16.mxu0 0
    %608 = vmatpush1.bf16.msra.mxu0 0
    %609 = vmatprep.subr.bf16.mxu0 0
    %610 = vmatpush1.bf16.msra.mxu0 0
    %611 = vmatprep.subr.bf16.mxu0 0
    %612 = vmatpush1.bf16.msra.mxu0 0
    %613 = vmatprep.subr.bf16.mxu0 0
    %614 = vmatpush1.bf16.msra.mxu0 0
    %615 = vmatprep.subr.bf16.mxu0 0
    %616 = vmatpush1.bf16.msra.mxu0 0
    %617 = vmatprep.subr.bf16.mxu0 0
    %618 = vmatpush1.bf16.msra.mxu0 0
    %619 = vmatprep.subr.bf16.mxu0 0
    %620 = vmatpush1.bf16.msra.mxu0 0
    %621 = vmatprep.subr.bf16.mxu0 0
    %622 = vmatpush1.bf16.msra.mxu0 0
    %623 = vmatprep.subr.bf16.mxu0 0
    %624 = vmatpush1.bf16.msra.mxu0 0
    %625 = vmatprep.mubr.bf16.mxu0 0
    %626 = vmatmul.mubr.bf16.gmra.mrb[0].mxu0 %v591
    %v627 = vpop.f32.mrb[0].mxu0
    %v628 = vadd.f32 0.0, %v627
    %v629 = vpop.f32.mrb[0].mxu0
    %v630 = vpop.f32.mrb[0].mxu0
    %v631 = vpop.f32.mrb[0].mxu0
    %632 = vdwg.mxu0
    %v633 = vadd.f32 %v585, %v628
    %v634 = vxor.u32 %v633, 2147483648
    %v635 = vmul.f32 %v634, 1.442695
    %v636 = vpow.pop %v635
    %v637 = vadd.f32 %v636, 1.0
    %v638 = vrcp.pop %v637
    %v639 = vmul.f32 1.0, %v638
    %v640 = vadd.f32 %v628, %v258
    %642 = vrot.lane.b32.xlu0 %v640, 64
    %v643 = vpop.permute.xlu0 %642
    %v645 = vmul.f32 %v639, %v643
    %647 = vrot.lane.b32.xlu0 %v645, 64
    %v648 = vpop.permute.xlu0 %647
    %v650 = vadd.f32 %v585, %v648
    %v651 = vtanh.pop %v650
    %v652 = vsub.f32 1.0, %v639
    %654 = vrot.lane.b32.xlu0 %v651, 96
    %v655 = vpop.permute.xlu0 %654
    %v657 = vmul.f32 %v652, %v655
    %v658 = vmul.f32 %v639, %v583
    %v659 = vadd.f32 %v657, %v658
    %s660 = scalar_lea.vmem [#allocation2], 48
    %v661 = vld [vmem:[%s660] sm:$0xff]
    %v662 = vpack.c.bf16 %v659, %v659
    %664 = vrot.lane.b32.xlu0 %v662, 96
    %v665 = vpop.permute.xlu0 %664
    %v667 = vsel %vm206, %v665, 0
    %669 = vmatprep.subr.bf16.mxu0 0
    %670 = vmatpush1.bf16.msra.mxu0 %v202
    %671 = vmatprep.subr.bf16.mxu0 0
    %672 = vmatpush1.bf16.msra.mxu0 %v203
    %673 = vmatprep.subr.bf16.mxu0 0
    %674 = vmatpush1.bf16.msra.mxu0 0
    %675 = vmatprep.subr.bf16.mxu0 0
    %676 = vmatpush1.bf16.msra.mxu0 0
    %677 = vmatprep.subr.bf16.mxu0 0
    %678 = vmatpush1.bf16.msra.mxu0 0
    %679 = vmatprep.subr.bf16.mxu0 0
    %680 = vmatpush1.bf16.msra.mxu0 0
    %681 = vmatprep.subr.bf16.mxu0 0
    %682 = vmatpush1.bf16.msra.mxu0 0
    %683 = vmatprep.subr.bf16.mxu0 0
    %684 = vmatpush1.bf16.msra.mxu0 0
    %685 = vmatprep.subr.bf16.mxu0 0
    %686 = vmatpush1.bf16.msra.mxu0 0
    %687 = vmatprep.subr.bf16.mxu0 0
    %688 = vmatpush1.bf16.msra.mxu0 0
    %689 = vmatprep.subr.bf16.mxu0 0
    %690 = vmatpush1.bf16.msra.mxu0 0
    %691 = vmatprep.subr.bf16.mxu0 0
    %692 = vmatpush1.bf16.msra.mxu0 0
    %693 = vmatprep.subr.bf16.mxu0 0
    %694 = vmatpush1.bf16.msra.mxu0 0
    %695 = vmatprep.subr.bf16.mxu0 0
    %696 = vmatpush1.bf16.msra.mxu0 0
    %697 = vmatprep.subr.bf16.mxu0 0
    %698 = vmatpush1.bf16.msra.mxu0 0
    %699 = vmatprep.subr.bf16.mxu0 0
    %700 = vmatpush1.bf16.msra.mxu0 0
    %701 = vmatprep.mubr.bf16.mxu0 0
    %702 = vmatmul.mubr.bf16.gmra.mrb[0].mxu0 %v667
    %v703 = vpop.f32.mrb[0].mxu0
    %v704 = vadd.f32 0.0, %v703
    %v705 = vpop.f32.mrb[0].mxu0
    %v706 = vpop.f32.mrb[0].mxu0
    %v707 = vpop.f32.mrb[0].mxu0
    %708 = vdwg.mxu0
    %v709 = vadd.f32 %v661, %v704
    %v710 = vxor.u32 %v709, 2147483648
    %v711 = vmul.f32 %v710, 1.442695
    %v712 = vpow.pop %v711
    %v713 = vadd.f32 %v712, 1.0
    %v714 = vrcp.pop %v713
    %v715 = vmul.f32 1.0, %v714
    %v716 = vadd.f32 %v704, %v258
    %718 = vrot.lane.b32.xlu0 %v716, 64
    %v719 = vpop.permute.xlu0 %718
    %v721 = vmul.f32 %v715, %v719
    %723 = vrot.lane.b32.xlu0 %v721, 64
    %v724 = vpop.permute.xlu0 %723
    %v726 = vadd.f32 %v661, %v724
    %v727 = vtanh.pop %v726
    %v728 = vsub.f32 1.0, %v715
    %730 = vrot.lane.b32.xlu0 %v727, 96
    %v731 = vpop.permute.xlu0 %730
    %v733 = vmul.f32 %v728, %v731
    %v734 = vmul.f32 %v715, %v659
    %v735 = vadd.f32 %v733, %v734
    %s736 = scalar_lea.vmem [#allocation2], 56
    %v737 = vld [vmem:[%s736] sm:$0xff]
    %v738 = vpack.c.bf16 %v735, %v735
    %740 = vrot.lane.b32.xlu0 %v738, 96
    %v741 = vpop.permute.xlu0 %740
    %v743 = vsel %vm206, %v741, 0
    %745 = vmatprep.subr.bf16.mxu0 0
    %746 = vmatpush1.bf16.msra.mxu0 %v202
    %747 = vmatprep.subr.bf16.mxu0 0
    %748 = vmatpush1.bf16.msra.mxu0 %v203
    %749 = vmatprep.subr.bf16.mxu0 0
    %750 = vmatpush1.bf16.msra.mxu0 0
    %751 = vmatprep.subr.bf16.mxu0 0
    %752 = vmatpush1.bf16.msra.mxu0 0
    %753 = vmatprep.subr.bf16.mxu0 0
    %754 = vmatpush1.bf16.msra.mxu0 0
    %755 = vmatprep.subr.bf16.mxu0 0
    %756 = vmatpush1.bf16.msra.mxu0 0
    %757 = vmatprep.subr.bf16.mxu0 0
    %758 = vmatpush1.bf16.msra.mxu0 0
    %759 = vmatprep.subr.bf16.mxu0 0
    %760 = vmatpush1.bf16.msra.mxu0 0
    %761 = vmatprep.subr.bf16.mxu0 0
    %762 = vmatpush1.bf16.msra.mxu0 0
    %763 = vmatprep.subr.bf16.mxu0 0
    %764 = vmatpush1.bf16.msra.mxu0 0
    %765 = vmatprep.subr.bf16.mxu0 0
    %766 = vmatpush1.bf16.msra.mxu0 0
    %767 = vmatprep.subr.bf16.mxu0 0
    %768 = vmatpush1.bf16.msra.mxu0 0
    %769 = vmatprep.subr.bf16.mxu0 0
    %770 = vmatpush1.bf16.msra.mxu0 0
    %771 = vmatprep.subr.bf16.mxu0 0
    %772 = vmatpush1.bf16.msra.mxu0 0
    %773 = vmatprep.subr.bf16.mxu0 0
    %774 = vmatpush1.bf16.msra.mxu0 0
    %775 = vmatprep.subr.bf16.mxu0 0
    %776 = vmatpush1.bf16.msra.mxu0 0
    %777 = vmatprep.mubr.bf16.mxu0 0
    %778 = vmatmul.mubr.bf16.gmra.mrb[0].mxu0 %v743
    %v779 = vpop.f32.mrb[0].mxu0
    %v780 = vadd.f32 0.0, %v779
    %v781 = vpop.f32.mrb[0].mxu0
    %v782 = vpop.f32.mrb[0].mxu0
    %v783 = vpop.f32.mrb[0].mxu0
    %784 = vdwg.mxu0
    %v785 = vadd.f32 %v737, %v780
    %v786 = vxor.u32 %v785, 2147483648
    %v787 = vmul.f32 %v786, 1.442695
    %v788 = vpow.pop %v787
    %v789 = vadd.f32 %v788, 1.0
    %v790 = vrcp.pop %v789
    %v791 = vmul.f32 1.0, %v790
    %v792 = vadd.f32 %v780, %v258
    %794 = vrot.lane.b32.xlu0 %v792, 64
    %v795 = vpop.permute.xlu0 %794
    %v797 = vmul.f32 %v791, %v795
    %799 = vrot.lane.b32.xlu0 %v797, 64
    %v800 = vpop.permute.xlu0 %799
    %v802 = vadd.f32 %v737, %v800
    %v803 = vtanh.pop %v802
    %v804 = vsub.f32 1.0, %v791
    %806 = vrot.lane.b32.xlu0 %v803, 96
    %v807 = vpop.permute.xlu0 %806
    %v809 = vmul.f32 %v804, %v807
    %v810 = vmul.f32 %v791, %v735
    %v811 = vadd.f32 %v809, %v810
    %v812 = vld [vmem:[%s5] sm:$0xff]
    %v813 = vld [vmem:[%s5 + $0x8] sm:$0xff]
    %v814 = vld [vmem:[%s5 + $0x10] sm:$0xff]
    %v815 = vld [vmem:[%s5 + $0x18] sm:$0xff]
    %v816 = vld [vmem:[%s6] sm:$0x1]
    %v818 = vlaneseq
    %v819 = vshrl.u32 %v818, 7
    %v820 = vsub.s32 0, %v819
    %v821 = vrot.slane %v816, %v820
    %824 = vrot.lane.b32.xlu0 %v811, 96
    %v825 = vpop.permute.xlu0 %824
    %v826 = vsel %vm206, %v825, 0
    %828 = vmatprep.subr.mxu0 0.0
    %829 = vmatpush1.msra.mxu0 %v812
    %830 = vmatprep.subr.mxu0 0.0
    %831 = vmatpush1.msra.mxu0 %v813
    %832 = vmatprep.subr.mxu0 0.0
    %833 = vmatpush1.msra.mxu0 %v814
    %834 = vmatprep.subr.mxu0 0.0
    %835 = vmatpush1.msra.mxu0 %v815
    %836 = vmatprep.subr.mxu0 0.0
    %837 = vmatpush1.msra.mxu0 0.0
    %838 = vmatprep.subr.mxu0 0.0
    %839 = vmatpush1.msra.mxu0 0.0
    %840 = vmatprep.subr.mxu0 0.0
    %841 = vmatpush1.msra.mxu0 0.0
    %842 = vmatprep.subr.mxu0 0.0
    %843 = vmatpush1.msra.mxu0 0.0
    %844 = vmatprep.subr.mxu0 0.0
    %845 = vmatpush1.msra.mxu0 0.0
    %846 = vmatprep.subr.mxu0 0.0
    %847 = vmatpush1.msra.mxu0 0.0
    %848 = vmatprep.subr.mxu0 0.0
    %849 = vmatpush1.msra.mxu0 0.0
    %850 = vmatprep.subr.mxu0 0.0
    %851 = vmatpush1.msra.mxu0 0.0
    %852 = vmatprep.subr.mxu0 0.0
    %853 = vmatpush1.msra.mxu0 0.0
    %854 = vmatprep.subr.mxu0 0.0
    %855 = vmatpush1.msra.mxu0 0.0
    %856 = vmatprep.subr.mxu0 0.0
    %857 = vmatpush1.msra.mxu0 0.0
    %858 = vmatprep.subr.mxu0 0.0
    %859 = vmatpush1.msra.mxu0 0.0
    %860 = vmatprep.subr.mxu0 0.0
    %861 = vmatpush1.msra.mxu0 0.0
    %862 = vmatprep.subr.mxu0 0.0
    %863 = vmatpush1.msra.mxu0 0.0
    %864 = vmatprep.subr.mxu0 0.0
    %865 = vmatpush1.msra.mxu0 0.0
    %866 = vmatprep.subr.mxu0 0.0
    %867 = vmatpush1.msra.mxu0 0.0
    %868 = vmatprep.subr.mxu0 0.0
    %869 = vmatpush1.msra.mxu0 0.0
    %870 = vmatprep.subr.mxu0 0.0
    %871 = vmatpush1.msra.mxu0 0.0
    %872 = vmatprep.subr.mxu0 0.0
    %873 = vmatpush1.msra.mxu0 0.0
    %874 = vmatprep.subr.mxu0 0.0
    %875 = vmatpush1.msra.mxu0 0.0
    %876 = vmatprep.subr.mxu0 0.0
    %877 = vmatpush1.msra.mxu0 0.0
    %878 = vmatprep.subr.mxu0 0.0
    %879 = vmatpush1.msra.mxu0 0.0
    %880 = vmatprep.subr.mxu0 0.0
    %881 = vmatpush1.msra.mxu0 0.0
    %882 = vmatprep.subr.mxu0 0.0
    %883 = vmatpush1.msra.mxu0 0.0
    %884 = vmatprep.subr.mxu0 0.0
    %885 = vmatpush1.msra.mxu0 0.0
    %886 = vmatprep.subr.mxu0 0.0
    %887 = vmatpush1.msra.mxu0 0.0
    %888 = vmatprep.subr.mxu0 0.0
    %889 = vmatpush1.msra.mxu0 0.0
    %890 = vmatprep.subr.mxu0 0.0
    %891 = vmatpush1.msra.mxu0 0.0
    %892 = vmatprep.mubr.f32.mxu0 0.0
    %893 = vmatmul.mubr.f32.gmra.mrb[0].mxu0 %v826
    %v894 = vpop.f32.mrb[0].mxu0
    %v895 = vadd.f32 %v821, %v894
    %v896 = vpop.f32.mrb[0].mxu0
    %897 = vdwg.mxu0
    %898 = vst [vmem:[#allocation3] sm:$0xff] %v895
    // Predicated region
    $region30: #{tpu_custom_call.1} parent=1 // pred_check
      _
    $region31: #{tpu_custom_call.1} parent=1 // pred_check_branch
      %900 = sbr.rel (0) target = $region33
    $region32: #{tpu_custom_call.1} parent=1 // pred_region
      %s902 = ssub.s32 128, 128
      %903 = vsyncadd [#allocation4], %s902
      %s905 = sshll.u32 [#allocation3], 4
      %s906 = int_to_ptr.vmem [resolvable:$true] %s905
      %908 = dma.vmem_to_hbm [thread:$0]  %s906, 128, %s7, [#allocation4]
    $region33: #{tpu_custom_call.1} parent=1 // pred_fallthru
      _
    // Predicated region
    $region34: #{tpu_custom_call.1} parent=1 // pred_check
      _
    $region35: #{tpu_custom_call.1} parent=1 // pred_check_branch
      %910 = sbr.rel (0) target = $region37
    $region36: #{tpu_custom_call.1} parent=1 // pred_region
      %911 = dma.done [#allocation4], 128
    $region37: #{tpu_custom_call.1} parent=1 // pred_fallthru
      _
    %912 = vsyncpa [#allocation4], 1

</llo_original>
